<compile_context>
chip_gen: v7x
topology: tpu7x:2x2x1
jax: 0.10.0
libtpu: 0.0.40
codegen_flags: <defaults>
</compile_context>

<pallas_src>
import jax
import jax.numpy as jnp
from jax.experimental import pallas as pl
from jax.experimental.pallas import tpu as pltpu

HIDDEN = 128            # per-head hidden size (nn.Linear(s_dim, 128))
FUSED_H = 2 * HIDDEN    # 256 = policy hidden | value hidden, one MXU pass


def _round_up(n, m):
    return ((n + m - 1) // m) * m


def net_kernel(x_ref, w1_ref, w2_ref, out_ref):
    """Fused A3C forward: one hidden matmul + tanh, one head matmul.

    x_ref:  [block_b, in_lanes]  cols 0..s_dim-1 = state, col s_dim = 1 (bias), rest 0
    w1_ref: [in_lanes, 256]      [wp1|wv1] weights, fused layer-1 bias in row s_dim
    w2_ref: [264, out_lanes]     block-diagonal head weights rows 0..255, bias row 256
    out_ref:[block_b, out_lanes] cols 0..a_dim-1 = logits, col a_dim = value, rest 0
    """
    x = x_ref[...]
    w1 = w1_ref[...]
    # Layer 1: bias rides the MXU via the ones column of x.
    h = jnp.tanh(jnp.dot(x, w1, preferred_element_type=jnp.float32))

    # Layer 2: block-diagonal fused heads; bias row read at a sublane-aligned offset.
    w2 = w2_ref[pl.ds(0, FUSED_H), :]
    b2 = w2_ref[pl.ds(FUSED_H, 1), :].astype(jnp.float32)
    y = jnp.dot(h.astype(w2.dtype), w2, preferred_element_type=jnp.float32) + b2
    out_ref[...] = y


def init_params(key, s_dim, a_dim, hidden=HIDDEN):
    """Matches set_init: weights ~ N(0, 0.1), biases = 0.
    Weights stored as [in, out] (transposed vs. PyTorch)."""
    assert hidden == HIDDEN
    k1, k2, k3, k4 = jax.random.split(key, 4)
    std = 0.1
    return {
        "wp1": jax.random.normal(k1, (s_dim, hidden), jnp.float32) * std,
        "bp1": jnp.zeros((hidden,), jnp.float32),
        "wp2": jax.random.normal(k2, (hidden, a_dim), jnp.float32) * std,
        "bp2": jnp.zeros((a_dim,), jnp.float32),
        "wv1": jax.random.normal(k3, (s_dim, hidden), jnp.float32) * std,
        "bv1": jnp.zeros((hidden,), jnp.float32),
        "wv2": jax.random.normal(k4, (hidden, 1), jnp.float32) * std,
        "bv2": jnp.zeros((1,), jnp.float32),
    }


def pack_params(p, *, dtype=jnp.float32):
    """Pack the 8 PyTorch-style tensors into 2 fused, bias-augmented arrays."""
    s_dim, hidden = p["wp1"].shape
    assert hidden == HIDDEN
    a_dim = p["wp2"].shape[1]
    in_lanes = _round_up(s_dim + 1, 8)     # state + ones column, sublane aligned
    out_lanes = _round_up(a_dim + 1, 8)    # logits | value, narrow lane-padded output

    # W1_aug: [in_lanes, 256]; row s_dim is the fused layer-1 bias, rest zero-padded.
    w1 = jnp.zeros((in_lanes, FUSED_H), jnp.float32)
    w1 = w1.at[:s_dim, :HIDDEN].set(p["wp1"])
    w1 = w1.at[:s_dim, HIDDEN:].set(p["wv1"])
    w1 = w1.at[s_dim, :HIDDEN].set(p["bp1"])
    w1 = w1.at[s_dim, HIDDEN:].set(p["bv1"])

    # W2_aug: [264, out_lanes]; block-diagonal so policy/value paths don't mix.
    # Off-diagonal blocks are exact zeros (correctness requirement). Bias at
    # row 256 (tile-aligned), rows 257..263 are zero padding.
    w2 = jnp.zeros((FUSED_H + 8, out_lanes), jnp.float32)
    w2 = w2.at[:HIDDEN, :a_dim].set(p["wp2"])
    w2 = w2.at[HIDDEN:FUSED_H, a_dim].set(p["wv2"][:, 0])
    w2 = w2.at[FUSED_H, :a_dim].set(p["bp2"])
    w2 = w2.at[FUSED_H, a_dim].set(p["bv2"][0])

    return {
        "w1": w1.astype(dtype),
        "w2": w2.astype(dtype),
        "s_dim": s_dim,
        "a_dim": a_dim,
        "in_lanes": in_lanes,
        "out_lanes": out_lanes,
        "dtype": dtype,
    }


def _pick_block_b(B, *, block_cap=2048):
    """Batch tile size: single step at small B (launch-bound), >= 2 steps at
    B >= 256 (lights up v7x's second TensorCore via the 'parallel' axis),
    capped at block_cap rows to amortize serial-grid overhead on v5e/v6e."""
    if B < 256:
        return _round_up(B, 8)
    return min(_round_up(pl.cdiv(B, 2), 8), block_cap)


def net_forward(x, packed, *, block_cap=2048):
    """x: [B, s_dim] float32 -> (logits [B, a_dim], values [B, 1]) float32."""
    B, s_dim = x.shape
    assert s_dim == packed["s_dim"]
    a_dim = packed["a_dim"]
    in_lanes = packed["in_lanes"]
    out_lanes = packed["out_lanes"]
    w1, w2 = packed["w1"], packed["w2"]
    dtype = packed["dtype"]

    block_b = _pick_block_b(B, block_cap=block_cap)
    grid_b = pl.cdiv(B, block_b)
    b_pad = grid_b * block_b

    # Augmented input: [x | 1 | 0...] so the layer-1 bias rides the MXU; batch
    # zero-padded to a whole number of blocks (padded rows are sliced off).
    x_aug = jnp.zeros((b_pad, in_lanes), dtype)
    x_aug = x_aug.at[:B, :s_dim].set(x.astype(dtype))
    x_aug = x_aug.at[:B, s_dim].set(1.0)

    bytes_accessed = (
        x_aug.size * x_aug.dtype.itemsize
        + grid_b * (w1.size + w2.size) * w1.dtype.itemsize
        + b_pad * out_lanes * 4
    )
    cost = pl.CostEstimate(
        flops=2 * b_pad * (in_lanes * FUSED_H + FUSED_H * out_lanes),
        transcendentals=b_pad * FUSED_H,
        bytes_accessed=bytes_accessed,
    )

    out = pl.pallas_call(
        net_kernel,
        out_shape=jax.ShapeDtypeStruct((b_pad, out_lanes), jnp.float32),
        grid=(grid_b,),
        in_specs=[
            pl.BlockSpec((block_b, in_lanes), lambda i: (i, 0)),
            pl.BlockSpec(w1.shape, lambda i: (0, 0)),
            pl.BlockSpec(w2.shape, lambda i: (0, 0)),
        ],
        out_specs=pl.BlockSpec((block_b, out_lanes), lambda i: (i, 0)),
        compiler_params=pltpu.CompilerParams(
            dimension_semantics=("parallel",)),
        cost_estimate=cost,
    )(x_aug, w1, w2)

    # TODO(synk): choose_action (softmax + Categorical sampling) and loss_func
    # stay in plain JAX; ideally downstream consumes the fused [B, out_lanes]
    # slab directly (or softmax/log-prob is fused into the kernel tail) instead
    # of re-slicing here.
    logits = out[:B, :a_dim]
    values = out[:B, a_dim:a_dim + 1]
    return logits, values


def net_forward_ref(x, p):
    pi1 = jnp.tanh(x @ p["wp1"] + p["bp1"])
    logits = pi1 @ p["wp2"] + p["bp2"]
    v1 = jnp.tanh(x @ p["wv1"] + p["bv1"])
    values = v1 @ p["wv2"] + p["bv2"]
    return logits, values


if __name__ == "__main__":
    key = jax.random.PRNGKey(0)
    k_params, k_x1, k_x2 = jax.random.split(key, 3)

    # Small CartPole-like dims for the smoke test.
    B, S_DIM, A_DIM = 8, 4, 2
    params = init_params(k_params, S_DIM, A_DIM)

    # --- f32 weights, tiny batch (single grid step), tight tolerance ---
    packed_f32 = pack_params(params, dtype=jnp.float32)
    x_small = jax.random.normal(k_x1, (B, S_DIM), jnp.float32)
    logits, values = net_forward(x_small, packed_f32)
    logits = jax.block_until_ready(logits)
    values = jax.block_until_ready(values)
    ref_logits, ref_values = net_forward_ref(x_small, params)
    assert logits.shape == (B, A_DIM) and values.shape == (B, 1)
    assert jnp.allclose(logits, ref_logits, atol=1e-5, rtol=1e-5)
    assert jnp.allclose(values, ref_values, atol=1e-5, rtol=1e-5)

    # --- bf16 storage, ragged batch (exercises padding + grid >= 2) ---
    B2 = 300
    packed_bf16 = pack_params(params, dtype=jnp.bfloat16)
    x_big = jax.random.normal(k_x2, (B2, S_DIM), jnp.float32)
    logits2, values2 = net_forward(x_big, packed_bf16)
    logits2 = jax.block_until_ready(logits2)
    values2 = jax.block_until_ready(values2)
    ref_logits2, ref_values2 = net_forward_ref(x_big, params)
    assert logits2.shape == (B2, A_DIM) and values2.shape == (B2, 1)
    assert jnp.allclose(logits2, ref_logits2, atol=5e-2, rtol=5e-2)
    assert jnp.allclose(values2, ref_values2, atol=5e-2, rtol=5e-2)

    print("KERNEL_OK")
</pallas_src>

<mosaic_0001>
module attributes {stable_mosaic.version = 11 : i64} {
  func.func @net_kernel(%arg0: i32, %arg1: memref<8x8xf32, #tpu.memory_space<vmem>>, %arg2: memref<8x256xf32, #tpu.memory_space<vmem>>, %arg3: memref<264x8xf32, #tpu.memory_space<vmem>>, %arg4: memref<8x8xf32, #tpu.memory_space<vmem>>) attributes {dimension_semantics = [#tpu.dimension_semantics<parallel>], iteration_bounds = array<i64: 1>, scalar_prefetch = 0 : i64, scratch_operands = 0 : i64, tpu.core_type = #tpu.core_type<tc>, window_params = [{transform_indices = @transform_0, window_bounds = array<i64: 8, 8>}, {pipeline_mode = #tpu.pipeline_mode<synchronous>, transform_indices = @transform_1, window_bounds = array<i64: 8, 256>}, {pipeline_mode = #tpu.pipeline_mode<synchronous>, transform_indices = @transform_2, window_bounds = array<i64: 264, 8>}, {transform_indices = @transform_3, window_bounds = array<i64: 8, 8>}]} {
    %c0 = arith.constant 0 : index
    %c0_0 = arith.constant 0 : index
    %0 = vector.load %arg1[%c0, %c0_0] : memref<8x8xf32, #tpu.memory_space<vmem>>, vector<8x8xf32>
    %c0_1 = arith.constant 0 : index
    %c0_2 = arith.constant 0 : index
    %1 = vector.load %arg2[%c0_1, %c0_2] : memref<8x256xf32, #tpu.memory_space<vmem>>, vector<8x256xf32>
    %cst = arith.constant dense<0.000000e+00> : vector<8x256xf32>
    %2 = tpu.matmul %0, %1, %cst {dimension_numbers = #tpu.dot_dimension_numbers<[1], [0], [0], [1], [0, 0, 1, 1], [], []>} : vector<8x8xf32>, vector<8x256xf32>, vector<8x256xf32> -> vector<8x256xf32>
    %3 = math.tanh %2 : vector<8x256xf32>
    %c0_3 = arith.constant 0 : index
    %c0_4 = arith.constant 0 : index
    %4 = vector.load %arg3[%c0_3, %c0_4] : memref<264x8xf32, #tpu.memory_space<vmem>>, vector<256x8xf32>
    %c256 = arith.constant 256 : index
    %c0_5 = arith.constant 0 : index
    %5 = vector.load %arg3[%c256, %c0_5] : memref<264x8xf32, #tpu.memory_space<vmem>>, vector<1x8xf32>
    %cst_6 = arith.constant dense<0.000000e+00> : vector<8x8xf32>
    %6 = tpu.matmul %3, %4, %cst_6 {dimension_numbers = #tpu.dot_dimension_numbers<[1], [0], [0], [1], [0, 0, 1, 1], [], []>} : vector<8x256xf32>, vector<256x8xf32>, vector<8x8xf32> -> vector<8x8xf32>
    %7 = vector.broadcast %5 : vector<1x8xf32> to vector<8x8xf32>
    %8 = arith.addf %6, %7 : vector<8x8xf32>
    %c0_7 = arith.constant 0 : index
    %c0_8 = arith.constant 0 : index
    %9 = vector.load %arg4[%c0_7, %c0_8] : memref<8x8xf32, #tpu.memory_space<vmem>>, vector<8x8xf32>
    tpu.vector_store %arg4[%c0_7, %c0_8], %8 {strides = array<i32>} : memref<8x8xf32, #tpu.memory_space<vmem>>, vector<8x8xf32>,
    return
  }
  func.func @transform_0(%arg0: i32) -> (i32, i32) {
    %c0_i32 = arith.constant 0 : i32
    %c0_i32_0 = arith.constant 0 : i32
    return %arg0, %c0_i32 : i32, i32
  }
  func.func @transform_1(%arg0: i32) -> (i32, i32) {
    %c0_i32 = arith.constant 0 : i32
    %c0_i32_0 = arith.constant 0 : i32
    %c0_i32_1 = arith.constant 0 : i32
    return %c0_i32, %c0_i32_0 : i32, i32
  }
  func.func @transform_2(%arg0: i32) -> (i32, i32) {
    %c0_i32 = arith.constant 0 : i32
    %c0_i32_0 = arith.constant 0 : i32
    %c0_i32_1 = arith.constant 0 : i32
    return %c0_i32, %c0_i32_0 : i32, i32
  }
  func.func @transform_3(%arg0: i32) -> (i32, i32) {
    %c0_i32 = arith.constant 0 : i32
    %c0_i32_0 = arith.constant 0 : i32
    return %arg0, %c0_i32 : i32, i32
  }
}

</mosaic_0001>

<llo_original>
// kernel: tpu_custom_call.1
$region0: #{tpu_custom_call.1}
  #allocation0 [shape = 'u32[]', space=smem, size = 0x4, offset = 0x4, fixed_abs, tag = 'smem constant byte address 0x4 - core index']
  #allocation1 [shape = 'u32[144,128]{1,0:T(1,128)}', space=vmem, size = 0x12000, scoped, tag = 'internal scratch']
  %s0 = inlined_call_operand.vmem [shape: f32[8,8], index: 0, kind: input, shape index: {}]
  %s1 = inlined_call_operand.vmem [shape: f32[8,256], index: 1, kind: input, shape index: {}]
  %s2 = inlined_call_operand.vmem [shape: f32[264,8], index: 2, kind: input, shape index: {}]
  %s3 = inlined_call_operand.hbm [shape: f32[8,8], index: 3, kind: output, shape index: {}]
  %s4 = sld [smem:[#allocation0]]
  $region22: #{tpu_custom_call.1} parent=0
    _
  %s6 = ssub.s32 1, %s4
  %s7 = scalar_select 0, %s6, %s4
  $region1: #{tpu_custom_call.1} parent=0
    #allocation2 [shape = 'u8[4096]{0}', space=vmem, size = 0x1000, scoped, tag = 'output window, operand 0, single buffered']
    #allocation3 [shape = 's32[1]{0}', space=sflag, size = 0x4, scoped, tag = 'scoped memory for tpu_custom_call.1']
    %8 = vsyncpa [#allocation3], 0
    // Predicated region
    $region2: #{tpu_custom_call.1} parent=1 // pred_check
      _
    $region3: #{tpu_custom_call.1} parent=1 // pred_check_branch
      %10 = sbr.rel (0) target = $region5
    $region4: #{tpu_custom_call.1} parent=1 // pred_region
      _
    $region5: #{tpu_custom_call.1} parent=1 // pred_fallthru
      _
    // Predicated region
    $region6: #{tpu_custom_call.1} parent=1 // pred_check
      _
    $region7: #{tpu_custom_call.1} parent=1 // pred_check_branch
      %12 = sbr.rel (0) target = $region9
    $region8: #{tpu_custom_call.1} parent=1 // pred_region
      _
    $region9: #{tpu_custom_call.1} parent=1 // pred_fallthru
      _
    // Predicated region
    $region10: #{tpu_custom_call.1} parent=1 // pred_check
      _
    $region11: #{tpu_custom_call.1} parent=1 // pred_check_branch
      %14 = sbr.rel (0) target = $region13
    $region12: #{tpu_custom_call.1} parent=1 // pred_region
      _
    $region13: #{tpu_custom_call.1} parent=1 // pred_fallthru
      _
    %v15 = vld [vmem:[%s0] sm:$0xff]
    %v16 = vld [vmem:[%s1] sm:$0xff]
    %v17 = vld [vmem:[%s1 + $0x8] sm:$0xff]
    %vm18 = vcmask 64512
    %v20 = vsel %vm18, %v15, 0
    %22 = vmatprep.subr.mxu0 %v17
    %23 = vmatpush1.msra.mxu0 %v16
    %24 = vmatprep.subr.mxu0 0.0
    %25 = vmatpush1.msra.mxu0 0.0
    %26 = vmatprep.subr.mxu0 0.0
    %27 = vmatpush1.msra.mxu0 0.0
    %28 = vmatprep.subr.mxu0 0.0
    %29 = vmatpush1.msra.mxu0 0.0
    %30 = vmatprep.subr.mxu0 0.0
    %31 = vmatpush1.msra.mxu0 0.0
    %32 = vmatprep.subr.mxu0 0.0
    %33 = vmatpush1.msra.mxu0 0.0
    %34 = vmatprep.subr.mxu0 0.0
    %35 = vmatpush1.msra.mxu0 0.0
    %36 = vmatprep.subr.mxu0 0.0
    %37 = vmatpush1.msra.mxu0 0.0
    %38 = vmatprep.subr.mxu0 0.0
    %39 = vmatpush1.msra.mxu0 0.0
    %40 = vmatprep.subr.mxu0 0.0
    %41 = vmatpush1.msra.mxu0 0.0
    %42 = vmatprep.subr.mxu0 0.0
    %43 = vmatpush1.msra.mxu0 0.0
    %44 = vmatprep.subr.mxu0 0.0
    %45 = vmatpush1.msra.mxu0 0.0
    %46 = vmatprep.subr.mxu0 0.0
    %47 = vmatpush1.msra.mxu0 0.0
    %48 = vmatprep.subr.mxu0 0.0
    %49 = vmatpush1.msra.mxu0 0.0
    %50 = vmatprep.subr.mxu0 0.0
    %51 = vmatpush1.msra.mxu0 0.0
    %52 = vmatprep.subr.mxu0 0.0
    %53 = vmatpush1.msra.mxu0 0.0
    %54 = vmatprep.subr.mxu0 0.0
    %55 = vmatpush1.msra.mxu0 0.0
    %56 = vmatprep.subr.mxu0 0.0
    %57 = vmatpush1.msra.mxu0 0.0
    %58 = vmatprep.subr.mxu0 0.0
    %59 = vmatpush1.msra.mxu0 0.0
    %60 = vmatprep.subr.mxu0 0.0
    %61 = vmatpush1.msra.mxu0 0.0
    %62 = vmatprep.subr.mxu0 0.0
    %63 = vmatpush1.msra.mxu0 0.0
    %64 = vmatprep.subr.mxu0 0.0
    %65 = vmatpush1.msra.mxu0 0.0
    %66 = vmatprep.subr.mxu0 0.0
    %67 = vmatpush1.msra.mxu0 0.0
    %68 = vmatprep.subr.mxu0 0.0
    %69 = vmatpush1.msra.mxu0 0.0
    %70 = vmatprep.subr.mxu0 0.0
    %71 = vmatpush1.msra.mxu0 0.0
    %72 = vmatprep.subr.mxu0 0.0
    %73 = vmatpush1.msra.mxu0 0.0
    %74 = vmatprep.subr.mxu0 0.0
    %75 = vmatpush1.msra.mxu0 0.0
    %76 = vmatprep.subr.mxu0 0.0
    %77 = vmatpush1.msra.mxu0 0.0
    %78 = vmatprep.subr.mxu0 0.0
    %79 = vmatpush1.msra.mxu0 0.0
    %80 = vmatprep.subr.mxu0 0.0
    %81 = vmatpush1.msra.mxu0 0.0
    %82 = vmatprep.subr.mxu0 0.0
    %83 = vmatpush1.msra.mxu0 0.0
    %84 = vmatprep.subr.mxu0 0.0
    %85 = vmatpush1.msra.mxu0 0.0
    %86 = vmatprep.mubr.f32.mxu0 0.0
    %87 = vmatmul.mubr.f32.gmra.mrb[0].mxu0 %v20
    %v88 = vpop.f32.mrb[0].mxu0
    %v89 = vadd.f32 0.0, %v88
    %v90 = vpop.f32.mrb[0].mxu0
    %v91 = vadd.f32 0.0, %v90
    %92 = vdwg.mxu0
    %v93 = vtanh.pop %v89
    %v94 = vtanh.pop %v91
    %v95 = vld [vmem:[%s2] sm:$0xff]
    %v96 = vld [vmem:[%s2 + $0x8] sm:$0xff]
    %v97 = vld [vmem:[%s2 + $0x10] sm:$0xff]
    %v98 = vld [vmem:[%s2 + $0x18] sm:$0xff]
    %v99 = vld [vmem:[%s2 + $0x20] sm:$0xff]
    %v100 = vld [vmem:[%s2 + $0x28] sm:$0xff]
    %v101 = vld [vmem:[%s2 + $0x30] sm:$0xff]
    %v102 = vld [vmem:[%s2 + $0x38] sm:$0xff]
    %v103 = vld [vmem:[%s2 + $0x40] sm:$0xff]
    %v104 = vld [vmem:[%s2 + $0x48] sm:$0xff]
    %v105 = vld [vmem:[%s2 + $0x50] sm:$0xff]
    %v106 = vld [vmem:[%s2 + $0x58] sm:$0xff]
    %v107 = vld [vmem:[%s2 + $0x60] sm:$0xff]
    %v108 = vld [vmem:[%s2 + $0x68] sm:$0xff]
    %v109 = vld [vmem:[%s2 + $0x70] sm:$0xff]
    %v110 = vld [vmem:[%s2 + $0x78] sm:$0xff]
    %v111 = vld [vmem:[%s2 + $0x80] sm:$0xff]
    %v112 = vld [vmem:[%s2 + $0x88] sm:$0xff]
    %v113 = vld [vmem:[%s2 + $0x90] sm:$0xff]
    %v114 = vld [vmem:[%s2 + $0x98] sm:$0xff]
    %v115 = vld [vmem:[%s2 + $0xa0] sm:$0xff]
    %v116 = vld [vmem:[%s2 + $0xa8] sm:$0xff]
    %v117 = vld [vmem:[%s2 + $0xb0] sm:$0xff]
    %v118 = vld [vmem:[%s2 + $0xb8] sm:$0xff]
    %v119 = vld [vmem:[%s2 + $0xc0] sm:$0xff]
    %v120 = vld [vmem:[%s2 + $0xc8] sm:$0xff]
    %v121 = vld [vmem:[%s2 + $0xd0] sm:$0xff]
    %v122 = vld [vmem:[%s2 + $0xd8] sm:$0xff]
    %v123 = vld [vmem:[%s2 + $0xe0] sm:$0xff]
    %v124 = vld [vmem:[%s2 + $0xe8] sm:$0xff]
    %v125 = vld [vmem:[%s2 + $0xf0] sm:$0xff]
    %v126 = vld [vmem:[%s2 + $0xf8] sm:$0xff]
    %v127 = vld [vmem:[%s2 + $0x100] sm:$0x1]
    %v128 = vlaneseq
    %v129 = vshrl.u32 %v128, 7
    %v130 = vsub.s32 0, %v129
    %v131 = vrot.slane %v127, %v130
    %132 = vmatprep.subr.mxu0 0.0
    %133 = vmatpush1.msra.mxu0 %v95
    %134 = vmatprep.subr.mxu0 0.0
    %135 = vmatpush1.msra.mxu0 %v96
    %136 = vmatprep.subr.mxu0 0.0
    %137 = vmatpush1.msra.mxu0 %v97
    %138 = vmatprep.subr.mxu0 0.0
    %139 = vmatpush1.msra.mxu0 %v98
    %140 = vmatprep.subr.mxu0 0.0
    %141 = vmatpush1.msra.mxu0 %v99
    %142 = vmatprep.subr.mxu0 0.0
    %143 = vmatpush1.msra.mxu0 %v100
    %144 = vmatprep.subr.mxu0 0.0
    %145 = vmatpush1.msra.mxu0 %v101
    %146 = vmatprep.subr.mxu0 0.0
    %147 = vmatpush1.msra.mxu0 %v102
    %148 = vmatprep.subr.mxu0 0.0
    %149 = vmatpush1.msra.mxu0 %v103
    %150 = vmatprep.subr.mxu0 0.0
    %151 = vmatpush1.msra.mxu0 %v104
    %152 = vmatprep.subr.mxu0 0.0
    %153 = vmatpush1.msra.mxu0 %v105
    %154 = vmatprep.subr.mxu0 0.0
    %155 = vmatpush1.msra.mxu0 %v106
    %156 = vmatprep.subr.mxu0 0.0
    %157 = vmatpush1.msra.mxu0 %v107
    %158 = vmatprep.subr.mxu0 0.0
    %159 = vmatpush1.msra.mxu0 %v108
    %160 = vmatprep.subr.mxu0 0.0
    %161 = vmatpush1.msra.mxu0 %v109
    %162 = vmatprep.subr.mxu0 0.0
    %163 = vmatpush1.msra.mxu0 %v110
    %164 = vmatprep.subr.mxu0 0.0
    %165 = vmatpush1.msra.mxu0 %v111
    %166 = vmatprep.subr.mxu0 0.0
    %167 = vmatpush1.msra.mxu0 %v112
    %168 = vmatprep.subr.mxu0 0.0
    %169 = vmatpush1.msra.mxu0 %v113
    %170 = vmatprep.subr.mxu0 0.0
    %171 = vmatpush1.msra.mxu0 %v114
    %172 = vmatprep.subr.mxu0 0.0
    %173 = vmatpush1.msra.mxu0 %v115
    %174 = vmatprep.subr.mxu0 0.0
    %175 = vmatpush1.msra.mxu0 %v116
    %176 = vmatprep.subr.mxu0 0.0
    %177 = vmatpush1.msra.mxu0 %v117
    %178 = vmatprep.subr.mxu0 0.0
    %179 = vmatpush1.msra.mxu0 %v118
    %180 = vmatprep.subr.mxu0 0.0
    %181 = vmatpush1.msra.mxu0 %v119
    %182 = vmatprep.subr.mxu0 0.0
    %183 = vmatpush1.msra.mxu0 %v120
    %184 = vmatprep.subr.mxu0 0.0
    %185 = vmatpush1.msra.mxu0 %v121
    %186 = vmatprep.subr.mxu0 0.0
    %187 = vmatpush1.msra.mxu0 %v122
    %188 = vmatprep.subr.mxu0 0.0
    %189 = vmatpush1.msra.mxu0 %v123
    %190 = vmatprep.subr.mxu0 0.0
    %191 = vmatpush1.msra.mxu0 %v124
    %192 = vmatprep.subr.mxu0 0.0
    %193 = vmatpush1.msra.mxu0 %v125
    %194 = vmatprep.subr.mxu0 0.0
    %195 = vmatpush1.msra.mxu0 %v126
    %196 = vmatprep.mubr.f32.mxu0 %v94
    %197 = vmatmul.mubr.f32.gmra.mrb[0].mxu0 %v93
    %v198 = vpop.f32.mrb[0].mxu0
    %v199 = vadd.f32 %v131, %v198
    %v200 = vpop.f32.mrb[0].mxu0
    %201 = vdwg.mxu0
    %202 = vst.msk [vmem:[#allocation2] sm:$0xff] %vm18, %v199
    // Predicated region
    $region14: #{tpu_custom_call.1} parent=1 // pred_check
      _
    $region15: #{tpu_custom_call.1} parent=1 // pred_check_branch
      %204 = sbr.rel (0) target = $region17
    $region16: #{tpu_custom_call.1} parent=1 // pred_region
      %s206 = ssub.s32 128, 128
      %207 = vsyncadd [#allocation3], %s206
      %s209 = sshll.u32 [#allocation2], 4
      %s210 = int_to_ptr.vmem [resolvable:$true] %s209
      %212 = dma.vmem_to_hbm [thread:$0]  %s210, 128, %s3, [#allocation3]
    $region17: #{tpu_custom_call.1} parent=1 // pred_fallthru
      _
    // Predicated region
    $region18: #{tpu_custom_call.1} parent=1 // pred_check
      _
    $region19: #{tpu_custom_call.1} parent=1 // pred_check_branch
      %214 = sbr.rel (0) target = $region21
    $region20: #{tpu_custom_call.1} parent=1 // pred_region
      %215 = dma.done [#allocation3], 128
    $region21: #{tpu_custom_call.1} parent=1 // pred_fallthru
      _
    %216 = vsyncpa [#allocation3], 1

</llo_original>
